<compile_context>
chip_gen: v5e
topology: v5e:2x2
jax: 0.10.0
libtpu: 0.0.40
codegen_flags: <defaults>
</compile_context>

<pallas_src>
import functools

import jax
import jax.numpy as jnp
import numpy as np
from jax import lax
from jax.experimental import pallas as pl
from jax.experimental.pallas import tpu as pltpu

_MiB = 1024 * 1024


def _round_up(x, m):
    return (x + m - 1) // m * m


def _vmem_capacity_bytes():
    """Physical VMEM of the local TPU (used only for tile-size heuristics)."""
    try:
        return int(pltpu.get_tpu_info().vmem_capacity_bytes)
    except Exception:
        return 64 * _MiB          # conservative (v7x-class) default


# ---------------------------------------------------------------------------
# Kernel 1: unnormalized attention energies.
# ---------------------------------------------------------------------------
def energy_kernel(hidden_ref, outputs_ref, wh_ref, b_ref, wo_ref, v_ref,
                  out_ref):
    """One (batch-tile, seq-tile) grid step.

    Block shapes (Ap = attention dim padded to 128):
      hidden_ref  : (TB, Hp)        f32
      outputs_ref : (TB, TS, H2p)   f32 / bf16   (streamed; dominant HBM read)
      wh_ref      : (Hp, Ap)        f32
      b_ref       : (1, Ap)         f32          (bh + bo folded)
      wo_ref      : (H2p, Ap)       f32 / bf16
      v_ref       : (1, Ap)         f32
      out_ref     : (TB, TS)        f32          (unnormalized energies)
    """
    f32 = jnp.float32
    TB, TS, _ = outputs_ref.shape

    # Hidden projection + folded bias.  Tiny (TB x Hp x Ap) matmul recomputed
    # every step so BOTH grid axes stay "parallel" (keeps v7x's second
    # TensorCore busy even when the batch collapses to a single tile); Wh is
    # VMEM-resident, so this costs a few MXU pushes and no extra HBM traffic.
    hp = jnp.dot(hidden_ref[...], wh_ref[...], preferred_element_type=f32)
    hp = hp + b_ref[...]                                          # (TB, Ap)

    # Dominant matmul: outputs projection on the MXU with f32 accumulation.
    # TS is a multiple of 8 (or the full sequence), so the collapse of the
    # leading dims is layout-free.
    op = jnp.dot(outputs_ref[...].reshape(TB * TS, outputs_ref.shape[2]),
                 wo_ref[...], preferred_element_type=f32)         # (TB*TS, Ap)

    v_row = v_ref[...]                                            # (1, Ap)

    # Epilogue chunked per batch row: only (TS, Ap) temporaries live at once
    # instead of three (TB, TS, Ap) f32 slabs (VMEM / vector-store pressure).
    # tanh -> EUP, lane reduce -> XLU: both off the VALU critical path.
    # NOTE(perf): if a bundle dump shows the EUP as the critical unit after
    # bf16 streaming (possible on v6e/v7x), cast `x` to bf16 before the tanh;
    # keep f32 on v5e (no bf16 EUP) and on the exact-f32 path.
    for row in range(TB):
        x = op[row * TS:(row + 1) * TS, :] + hp[row:row + 1, :]   # (TS, Ap)
        e = jnp.tanh(x)
        out_ref[row, :] = jnp.sum(e * v_row, axis=-1)             # (TS,)


# ---------------------------------------------------------------------------
# Kernel 2: row softmax over the sequence axis (cheap trailing pass).
# ---------------------------------------------------------------------------
def softmax_kernel(e_ref, out_ref, *, s_real):
    e = e_ref[...]                                    # (TB, Sp) f32
    tb, sp = e.shape
    if s_real < sp:                                   # static: mask seq padding
        pos = lax.broadcasted_iota(jnp.int32, (tb, sp), 1)
        e = jnp.where(pos < s_real, e, jnp.float32(-1e30))
    m = jnp.max(e, axis=1, keepdims=True)
    p = jnp.exp(e - m)
    denom = jnp.sum(p, axis=1, keepdims=True)         # (TB, 1)
    # Exact reciprocal of the tiny denominator, then one broadcast multiply
    # (avoids a full-tile divide; exact so the f32 path stays ~bit-faithful).
    out_ref[...] = p * (1.0 / denom)


# ---------------------------------------------------------------------------
# Wrapper.
# ---------------------------------------------------------------------------
@functools.partial(jax.jit, static_argnames=("buffer_hints",))
def _alignment_forward_impl(hidden, outputs, wh, bh, wo, bo, v, *,
                            buffer_hints=True):
    f32 = jnp.float32
    B, H = hidden.shape
    _, S, H2 = outputs.shape
    A = wh.shape[1]

    # Stream the dominant tensor in the dtype the producer hands over
    # (bf16 recommended: halves HBM traffic + native-rate MXU).  Casting it
    # here would itself cost an extra HBM pass, so we deliberately do not.
    if outputs.dtype == jnp.bfloat16:
        stream_dtype = jnp.bfloat16
    else:
        stream_dtype = f32
        if outputs.dtype != f32:
            outputs = outputs.astype(f32)
    sb = jnp.dtype(stream_dtype).itemsize

    # ---- per-generation tile caps -----------------------------------------
    phys_vmem = _vmem_capacity_bytes()
    small_vmem = phys_vmem <= 80 * _MiB          # v7x-class (64 MiB VMEM)
    block_cap = 4 * _MiB if small_vmem else 12 * _MiB
    vmem_ceiling = 48 * _MiB if small_vmem else 96 * _MiB
    out_buffers = 3 if small_vmem else 2         # deepen pipelining on v7x

    # ---- batch tiling (never copy `outputs` for the common cases) ---------
    if B % 8 == 0:
        TB = 8
    elif B < 8:
        TB = B                                   # full-extent batch block
    else:
        TB = 8                                   # rare: pads batch upward
    Bp = _round_up(B, TB)

    # ---- keep dims pad-free whenever they are already tile-friendly -------
    Hp = H if H % 128 == 0 else _round_up(H, 128)
    H2p = H2 if H2 % 128 == 0 else _round_up(H2, 128)
    Ap = _round_up(A, 128)                       # weights are tiny: lane-dense

    # ---- sequence tiling ---------------------------------------------------
    per_seq_row = TB * H2p * sb
    if S % 128 == 0:
        TS = 128
        for cand in (256, 512, 1024):            # largest qualifying wins
            if S % cand == 0 and cand * per_seq_row <= block_cap:
                TS = cand
        Sp = S
    elif S % 8 == 0 and S * per_seq_row <= 2 * block_cap:
        TS, Sp = S, S                            # small/odd seq: one full tile
    else:
        # TODO(synk): last-resort pad copy of `outputs`; provide S % 128 == 0
        # (or S % 8 == 0 for short sequences) upstream to avoid it.
        Sp = _round_up(S, 128)
        TS = 128

    nb, ns = Bp // TB, Sp // TS

    # ---- pad ONLY what must be padded --------------------------------------
    pad_b, pad_s, pad_h2 = Bp - B, Sp - S, H2p - H2
    if pad_b or pad_s or pad_h2:
        # Not hit in the common case (B % 8 == 0 or B < 8, S % 128 == 0,
        # 2H % 128 == 0): then `outputs` streams straight from HBM with no
        # extra read/write pass.
        outputs = jnp.pad(outputs, ((0, pad_b), (0, pad_s), (0, pad_h2)))
    hidden = hidden.astype(f32)
    if pad_b or Hp != H:
        hidden = jnp.pad(hidden, ((0, pad_b), (0, Hp - H)))
    wh_p = jnp.pad(wh.astype(f32), ((0, Hp - H), (0, Ap - A)))
    b_p = jnp.pad((bh + bo).astype(f32), ((0, 0), (0, Ap - A)))    # folded bias
    wo_p = jnp.pad(wo, ((0, H2p - H2), (0, Ap - A))).astype(stream_dtype)
    v_p = jnp.pad(v.astype(f32), ((0, 0), (0, Ap - A)))

    # ---- VMEM budget & compiler params -------------------------------------
    block_bytes = TB * TS * H2p * sb
    if out_buffers > 2 and out_buffers * block_bytes > vmem_ceiling // 2:
        out_buffers = 2
    vmem_est = (out_buffers * block_bytes                  # streamed outputs
                + 2 * TB * TS * 4                          # energy out block
                + 2 * TB * Hp * 4                          # hidden block
                + 2 * ((Hp * Ap + 2 * Ap) * 4 + H2p * Ap * sb)   # weights
                + TB * TS * Ap * 4                         # `op` temporary
                + 4 * TS * Ap * 4)                         # per-chunk temps
    vmem_limit = int(min(vmem_ceiling, max(32 * _MiB, 2 * vmem_est)))

    cost = pl.CostEstimate(
        flops=(2 * Bp * Sp * H2p * Ap + 2 * Bp * Sp * Ap
               + 2 * nb * ns * TB * Hp * Ap),
        transcendentals=Bp * Sp * Ap,
        bytes_accessed=(Bp * Sp * H2p * sb + Bp * Sp * 4 + Bp * Hp * 4
                        + (Hp * Ap + 3 * Ap) * 4 + H2p * Ap * sb),
    )

    def _const_spec(shape):
        kw = {"pipeline_mode": pl.Buffered(1)} if buffer_hints else {}
        return pl.BlockSpec(shape, lambda i, j: (0, 0), **kw)

    outputs_kw = ({"pipeline_mode": pl.Buffered(out_buffers)}
                  if (buffer_hints and out_buffers != 2) else {})

    energies = pl.pallas_call(
        energy_kernel,
        out_shape=jax.ShapeDtypeStruct((Bp, Sp), jnp.float32),
        grid=(nb, ns),
        in_specs=[
            pl.BlockSpec((TB, Hp), lambda i, j: (i, 0)),            # hidden
            pl.BlockSpec((TB, TS, H2p), lambda i, j: (i, j, 0),     # outputs
                         **outputs_kw),
            _const_spec((Hp, Ap)),                                  # Wh
            _const_spec((1, Ap)),                                   # bh + bo
            _const_spec((H2p, Ap)),                                 # Wo
            _const_spec((1, Ap)),                                   # v
        ],
        out_specs=pl.BlockSpec((TB, TS), lambda i, j: (i, j)),
        compiler_params=pltpu.CompilerParams(
            dimension_semantics=("parallel", "parallel"),
            vmem_limit_bytes=vmem_limit,
        ),
        cost_estimate=cost,
    )(hidden, outputs, wh_p, b_p, wo_p, v_p)

    # Trailing softmax over the sequence axis: touches only Bp*Sp f32, i.e.
    # ~1/(2H) of the energy kernel's streamed bytes.
    # TODO(synk): for extreme sequence lengths (TB*Sp*4 approaching VMEM),
    # tile the softmax along S with an online max/sum instead.
    smax_vmem = int(min(vmem_ceiling, max(32 * _MiB, 8 * TB * Sp * 4)))
    attn = pl.pallas_call(
        functools.partial(softmax_kernel, s_real=S),
        out_shape=jax.ShapeDtypeStruct((Bp, Sp), jnp.float32),
        grid=(nb,),
        in_specs=[pl.BlockSpec((TB, Sp), lambda i: (i, 0))],
        out_specs=pl.BlockSpec((TB, Sp), lambda i: (i, 0)),
        compiler_params=pltpu.CompilerParams(
            dimension_semantics=("parallel",),
            vmem_limit_bytes=smax_vmem,
        ),
    )(energies)

    return attn[:B, :S]


def alignment_forward(hidden, outputs, wh, bh, wo, bo, v):
    """Attention weights [B, S].  `outputs` may be f32 or (recommended) bf16."""
    try:
        return _alignment_forward_impl(hidden, outputs, wh, bh, wo, bo, v,
                                       buffer_hints=True)
    except Exception:
        # This jax/Mosaic build rejected the pipeline-depth hints
        # (pl.Buffered); retry with default double-buffering.
        return _alignment_forward_impl(hidden, outputs, wh, bh, wo, bo, v,
                                       buffer_hints=False)


# ---------------------------------------------------------------------------
# Parameter init + pure-JAX reference.
# ---------------------------------------------------------------------------
def init_params(key, attention_dim, hidden_size):
    """Deterministic init mimicking nn.Linear's U(-1/sqrt(fan_in), .).

    Weights are stored as (in_features, out_features)."""
    k = jax.random.split(key, 5)
    bnd_h = 1.0 / np.sqrt(hidden_size)
    bnd_o = 1.0 / np.sqrt(2 * hidden_size)
    bnd_a = 1.0 / np.sqrt(attention_dim)
    wh = jax.random.uniform(k[0], (hidden_size, attention_dim),
                            jnp.float32, -bnd_h, bnd_h)
    bh = jax.random.uniform(k[1], (1, attention_dim), jnp.float32, -bnd_h, bnd_h)
    wo = jax.random.uniform(k[2], (2 * hidden_size, attention_dim),
                            jnp.float32, -bnd_o, bnd_o)
    bo = jax.random.uniform(k[3], (1, attention_dim), jnp.float32, -bnd_o, bnd_o)
    v = jax.random.uniform(k[4], (1, attention_dim), jnp.float32, -bnd_a, bnd_a)
    return wh, bh, wo, bo, v


def alignment_reference(hidden, outputs, wh, bh, wo, bo, v):
    """Pure-JAX reference matching the PyTorch forward exactly."""
    hp = hidden @ wh + bh[0]                          # (B, A)
    op = outputs @ wo + bo[0]                         # (B, S, A)
    energy = jnp.tanh(hp[:, None, :] + op) @ v[0]     # (B, S)
    return jax.nn.softmax(energy, axis=1)


if __name__ == "__main__":
    B, S, H, A = 2, 8, 32, 32   # batch, seq_len, hidden_size, attention_dim

    key = jax.random.PRNGKey(0)
    k_hid, k_out, k_par = jax.random.split(key, 3)

    hidden = jax.random.normal(k_hid, (B, H), jnp.float32)
    outputs = jax.random.normal(k_out, (B, S, 2 * H), jnp.float32)
    wh, bh, wo, bo, v = init_params(k_par, A, H)

    ref = alignment_reference(hidden, outputs, wh, bh, wo, bo, v)

    # f32 streaming: bit-faithful to the reference.
    attn = jax.block_until_ready(
        alignment_forward(hidden, outputs, wh, bh, wo, bo, v))
    assert attn.shape == (B, S)
    np.testing.assert_allclose(np.asarray(attn), np.asarray(ref),
                               rtol=1e-5, atol=1e-5)
    np.testing.assert_allclose(np.asarray(attn).sum(axis=1), np.ones(B),
                               rtol=1e-5, atol=1e-5)

    # bf16 streaming (recommended default): the producer hands the encoder
    # outputs over in bf16, so no extra HBM pass is spent casting them here.
    attn_bf16 = jax.block_until_ready(
        alignment_forward(hidden, outputs.astype(jnp.bfloat16),
                          wh, bh, wo, bo, v))
    np.testing.assert_allclose(np.asarray(attn_bf16), np.asarray(ref),
                               rtol=5e-2, atol=2e-2)

    print("KERNEL_OK")
</pallas_src>

<mosaic_0001>
module attributes {stable_mosaic.version = 11 : i64} {
  func.func @softmax_kernel(%arg0: i32, %arg1: memref<2x8xf32, #tpu.memory_space<vmem>>, %arg2: memref<2x8xf32, #tpu.memory_space<vmem>>) attributes {dimension_semantics = [#tpu.dimension_semantics<parallel>], iteration_bounds = array<i64: 1>, scalar_prefetch = 0 : i64, scratch_operands = 0 : i64, tpu.core_type = #tpu.core_type<tc>, window_params = [{transform_indices = @transform_0, window_bounds = array<i64: 2, 8>}, {transform_indices = @transform_1, window_bounds = array<i64: 2, 8>}]} {
    %c0 = arith.constant 0 : index
    %c0_0 = arith.constant 0 : index
    %0 = vector.load %arg1[%c0, %c0_0] : memref<2x8xf32, #tpu.memory_space<vmem>>, vector<2x8xf32>
    %cst = arith.constant dense<0xFF800000> : vector<2xf32>
    %1 = vector.multi_reduction <maximumf>, %0, %cst [1] : vector<2x8xf32> to vector<2xf32>
    %2 = vector.shape_cast %1 : vector<2xf32> to vector<2x1xf32>
    %3 = vector.broadcast %2 : vector<2x1xf32> to vector<2x8xf32>
    %4 = arith.subf %0, %3 : vector<2x8xf32>
    %5 = math.exp %4 : vector<2x8xf32>
    %cst_1 = arith.constant dense<0.000000e+00> : vector<2xf32>
    %6 = vector.multi_reduction <add>, %5, %cst_1 [1] : vector<2x8xf32> to vector<2xf32>
    %7 = vector.shape_cast %6 : vector<2xf32> to vector<2x1xf32>
    %cst_2 = arith.constant 1.000000e+00 : f32
    %8 = vector.broadcast %cst_2 : f32 to vector<2x1xf32>
    %9 = arith.divf %8, %7 : vector<2x1xf32>
    %10 = vector.broadcast %9 : vector<2x1xf32> to vector<2x8xf32>
    %11 = arith.mulf %5, %10 : vector<2x8xf32>
    %c0_3 = arith.constant 0 : index
    %c0_4 = arith.constant 0 : index
    %12 = vector.load %arg2[%c0_3, %c0_4] : memref<2x8xf32, #tpu.memory_space<vmem>>, vector<2x8xf32>
    tpu.vector_store %arg2[%c0_3, %c0_4], %11 {strides = array<i32>} : memref<2x8xf32, #tpu.memory_space<vmem>>, vector<2x8xf32>,
    return
  }
  func.func @transform_0(%arg0: i32) -> (i32, i32) {
    %c0_i32 = arith.constant 0 : i32
    %c0_i32_0 = arith.constant 0 : i32
    return %arg0, %c0_i32 : i32, i32
  }
  func.func @transform_1(%arg0: i32) -> (i32, i32) {
    %c0_i32 = arith.constant 0 : i32
    %c0_i32_0 = arith.constant 0 : i32
    return %arg0, %c0_i32 : i32, i32
  }
}

module attributes {stable_mosaic.version = 11 : i64} {
  func.func @energy_kernel(%arg0: i32, %arg1: i32, %arg2: memref<2x128xf32, #tpu.memory_space<vmem>>, %arg3: memref<2x8x128xf32, #tpu.memory_space<vmem>>, %arg4: memref<128x128xf32, #tpu.memory_space<vmem>>, %arg5: memref<1x128xf32, #tpu.memory_space<vmem>>, %arg6: memref<128x128xf32, #tpu.memory_space<vmem>>, %arg7: memref<1x128xf32, #tpu.memory_space<vmem>>, %arg8: memref<2x8xf32, #tpu.memory_space<vmem>>) attributes {dimension_semantics = [#tpu.dimension_semantics<parallel>, #tpu.dimension_semantics<parallel>], iteration_bounds = array<i64: 1, 1>, scalar_prefetch = 0 : i64, scratch_operands = 0 : i64, tpu.core_type = #tpu.core_type<tc>, window_params = [{transform_indices = @transform_0, window_bounds = array<i64: 2, 128>}, {transform_indices = @transform_1, window_bounds = array<i64: 2, 8, 128>}, {pipeline_mode = #tpu.pipeline_mode<synchronous>, transform_indices = @transform_2, window_bounds = array<i64: 128, 128>}, {pipeline_mode = #tpu.pipeline_mode<synchronous>, transform_indices = @transform_3, window_bounds = array<i64: 1, 128>}, {pipeline_mode = #tpu.pipeline_mode<synchronous>, transform_indices = @transform_4, window_bounds = array<i64: 128, 128>}, {pipeline_mode = #tpu.pipeline_mode<synchronous>, transform_indices = @transform_5, window_bounds = array<i64: 1, 128>}, {transform_indices = @transform_6, window_bounds = array<i64: 2, 8>}]} {
    %c0 = arith.constant 0 : index
    %c0_0 = arith.constant 0 : index
    %0 = vector.load %arg2[%c0, %c0_0] : memref<2x128xf32, #tpu.memory_space<vmem>>, vector<2x128xf32>
    %c0_1 = arith.constant 0 : index
    %c0_2 = arith.constant 0 : index
    %1 = vector.load %arg4[%c0_1, %c0_2] : memref<128x128xf32, #tpu.memory_space<vmem>>, vector<128x128xf32>
    %cst = arith.constant dense<0.000000e+00> : vector<2x128xf32>
    %2 = tpu.matmul %0, %1, %cst {dimension_numbers = #tpu.dot_dimension_numbers<[1], [0], [0], [1], [0, 0, 1, 1], [], []>} : vector<2x128xf32>, vector<128x128xf32>, vector<2x128xf32> -> vector<2x128xf32>
    %c0_3 = arith.constant 0 : index
    %c0_4 = arith.constant 0 : index
    %3 = vector.load %arg5[%c0_3, %c0_4] : memref<1x128xf32, #tpu.memory_space<vmem>>, vector<1x128xf32>
    %4 = vector.broadcast %3 : vector<1x128xf32> to vector<2x128xf32>
    %5 = arith.addf %2, %4 : vector<2x128xf32>
    %c0_5 = arith.constant 0 : index
    %c0_6 = arith.constant 0 : index
    %c0_7 = arith.constant 0 : index
    %6 = vector.load %arg3[%c0_5, %c0_6, %c0_7] : memref<2x8x128xf32, #tpu.memory_space<vmem>>, vector<2x8x128xf32>
    %7 = vector.shape_cast %6 : vector<2x8x128xf32> to vector<16x128xf32>
    %c0_8 = arith.constant 0 : index
    %c0_9 = arith.constant 0 : index
    %8 = vector.load %arg6[%c0_8, %c0_9] : memref<128x128xf32, #tpu.memory_space<vmem>>, vector<128x128xf32>
    %cst_10 = arith.constant dense<0.000000e+00> : vector<16x128xf32>
    %9 = tpu.matmul %7, %8, %cst_10 {dimension_numbers = #tpu.dot_dimension_numbers<[1], [0], [0], [1], [0, 0, 1, 1], [], []>} : vector<16x128xf32>, vector<128x128xf32>, vector<16x128xf32> -> vector<16x128xf32>
    %c0_11 = arith.constant 0 : index
    %c0_12 = arith.constant 0 : index
    %10 = vector.load %arg7[%c0_11, %c0_12] : memref<1x128xf32, #tpu.memory_space<vmem>>, vector<1x128xf32>
    %11 = vector.extract_strided_slice %9 {offsets = [0, 0], sizes = [8, 128], strides = [1, 1]} : vector<16x128xf32> to vector<8x128xf32>
    %12 = vector.extract_strided_slice %5 {offsets = [0, 0], sizes = [1, 128], strides = [1, 1]} : vector<2x128xf32> to vector<1x128xf32>
    %13 = vector.broadcast %12 : vector<1x128xf32> to vector<8x128xf32>
    %14 = arith.addf %11, %13 : vector<8x128xf32>
    %15 = math.tanh %14 : vector<8x128xf32>
    %16 = vector.broadcast %10 : vector<1x128xf32> to vector<8x128xf32>
    %17 = arith.mulf %15, %16 : vector<8x128xf32>
    %cst_13 = arith.constant dense<0.000000e+00> : vector<8xf32>
    %18 = vector.multi_reduction <add>, %17, %cst_13 [1] : vector<8x128xf32> to vector<8xf32>
    %c0_14 = arith.constant 0 : index
    %c0_15 = arith.constant 0 : index
    %19 = vector.load %arg8[%c0_14, %c0_15] : memref<2x8xf32, #tpu.memory_space<vmem>>, vector<1x8xf32>
    %20 = vector.shape_cast %19 : vector<1x8xf32> to vector<8xf32>
    %21 = vector.shape_cast %18 : vector<8xf32> to vector<1x8xf32>
    tpu.vector_store %arg8[%c0_14, %c0_15], %21 {strides = array<i32>} : memref<2x8xf32, #tpu.memory_space<vmem>>, vector<1x8xf32>,
    %22 = vector.extract_strided_slice %9 {offsets = [8, 0], sizes = [8, 128], strides = [1, 1]} : vector<16x128xf32> to vector<8x128xf32>
    %23 = vector.extract_strided_slice %5 {offsets = [1, 0], sizes = [1, 128], strides = [1, 1]} : vector<2x128xf32> to vector<1x128xf32>
    %24 = vector.broadcast %23 : vector<1x128xf32> to vector<8x128xf32>
    %25 = arith.addf %22, %24 : vector<8x128xf32>
    %26 = math.tanh %25 : vector<8x128xf32>
    %27 = vector.broadcast %10 : vector<1x128xf32> to vector<8x128xf32>
    %28 = arith.mulf %26, %27 : vector<8x128xf32>
    %cst_16 = arith.constant dense<0.000000e+00> : vector<8xf32>
    %29 = vector.multi_reduction <add>, %28, %cst_16 [1] : vector<8x128xf32> to vector<8xf32>
    %c1 = arith.constant 1 : index
    %c0_17 = arith.constant 0 : index
    %30 = vector.load %arg8[%c1, %c0_17] : memref<2x8xf32, #tpu.memory_space<vmem>>, vector<1x8xf32>
    %31 = vector.shape_cast %30 : vector<1x8xf32> to vector<8xf32>
    %32 = vector.shape_cast %29 : vector<8xf32> to vector<1x8xf32>
    tpu.vector_store %arg8[%c1, %c0_17], %32 {strides = array<i32>} : memref<2x8xf32, #tpu.memory_space<vmem>>, vector<1x8xf32>,
    return
  }
  func.func @transform_0(%arg0: i32, %arg1: i32) -> (i32, i32) {
    %c0_i32 = arith.constant 0 : i32
    %c0_i32_0 = arith.constant 0 : i32
    return %arg0, %c0_i32 : i32, i32
  }
  func.func @transform_1(%arg0: i32, %arg1: i32) -> (i32, i32, i32) {
    %c0_i32 = arith.constant 0 : i32
    %c0_i32_0 = arith.constant 0 : i32
    return %arg0, %arg1, %c0_i32 : i32, i32, i32
  }
  func.func @transform_2(%arg0: i32, %arg1: i32) -> (i32, i32) {
    %c0_i32 = arith.constant 0 : i32
    %c0_i32_0 = arith.constant 0 : i32
    %c0_i32_1 = arith.constant 0 : i32
    return %c0_i32, %c0_i32_0 : i32, i32
  }
  func.func @transform_3(%arg0: i32, %arg1: i32) -> (i32, i32) {
    %c0_i32 = arith.constant 0 : i32
    %c0_i32_0 = arith.constant 0 : i32
    %c0_i32_1 = arith.constant 0 : i32
    return %c0_i32, %c0_i32_0 : i32, i32
  }
  func.func @transform_4(%arg0: i32, %arg1: i32) -> (i32, i32) {
    %c0_i32 = arith.constant 0 : i32
    %c0_i32_0 = arith.constant 0 : i32
    %c0_i32_1 = arith.constant 0 : i32
    return %c0_i32, %c0_i32_0 : i32, i32
  }
  func.func @transform_5(%arg0: i32, %arg1: i32) -> (i32, i32) {
    %c0_i32 = arith.constant 0 : i32
    %c0_i32_0 = arith.constant 0 : i32
    %c0_i32_1 = arith.constant 0 : i32
    return %c0_i32, %c0_i32_0 : i32, i32
  }
  func.func @transform_6(%arg0: i32, %arg1: i32) -> (i32, i32) {
    %c0_i32 = arith.constant 0 : i32
    return %arg0, %arg1 : i32, i32
  }
}

</mosaic_0001>

<llo_original>
// kernel: _alignment_forward_impl.2
$region0: #{_alignment_forward_impl.2}
  #allocation0 [shape = 'u32[]', space=smem, size = 0x4, offset = 0x4, fixed_abs, tag = 'smem constant byte address 0x4 - core index']
  #allocation1 [shape = 'u32[72,128]{1,0:T(1,128)}', space=vmem, size = 0x9000, scoped, tag = 'internal scratch']
  %s0 = inlined_call_operand.vmem [shape: f32[2,128], index: 0, kind: input, shape index: {}]
  %s1 = inlined_call_operand.vmem [shape: f32[2,8,128], index: 1, kind: input, shape index: {}]
  %s2 = inlined_call_operand.vmem [shape: f32[128,128], index: 2, kind: input, shape index: {}]
  %s3 = inlined_call_operand.vmem [shape: f32[1,128], index: 3, kind: input, shape index: {}]
  %s4 = inlined_call_operand.vmem [shape: f32[128,128], index: 4, kind: input, shape index: {}]
  %s5 = inlined_call_operand.vmem [shape: f32[1,128], index: 5, kind: input, shape index: {}]
  %s6 = inlined_call_operand.vmem [shape: f32[2,8], index: 6, kind: output, shape index: {}]
  %s7 = sld [smem:[#allocation0]]
  $region34: #{_alignment_forward_impl.2} parent=0
    _
  %s9 = ssub.s32 1, %s7
  %s10 = scalar_select 0, %s9, %s7
  // Predicated region
  $region2: #{_alignment_forward_impl.2} parent=0 // pred_check
    _
  $region3: #{_alignment_forward_impl.2} parent=0 // pred_check_branch
    %12 = sbr.rel (0) target = $region5
  $region4: #{_alignment_forward_impl.2} parent=0 // pred_region
    _
  $region5: #{_alignment_forward_impl.2} parent=0 // pred_fallthru
    _
  // Predicated region
  $region6: #{_alignment_forward_impl.2} parent=0 // pred_check
    _
  $region7: #{_alignment_forward_impl.2} parent=0 // pred_check_branch
    %14 = sbr.rel (0) target = $region9
  $region8: #{_alignment_forward_impl.2} parent=0 // pred_region
    _
  $region9: #{_alignment_forward_impl.2} parent=0 // pred_fallthru
    _
  // Predicated region
  $region10: #{_alignment_forward_impl.2} parent=0 // pred_check
    _
  $region11: #{_alignment_forward_impl.2} parent=0 // pred_check_branch
    %16 = sbr.rel (0) target = $region13
  $region12: #{_alignment_forward_impl.2} parent=0 // pred_region
    _
  $region13: #{_alignment_forward_impl.2} parent=0 // pred_fallthru
    _
  // Predicated region
  $region14: #{_alignment_forward_impl.2} parent=0 // pred_check
    _
  $region15: #{_alignment_forward_impl.2} parent=0 // pred_check_branch
    %18 = sbr.rel (0) target = $region17
  $region16: #{_alignment_forward_impl.2} parent=0 // pred_region
    _
  $region17: #{_alignment_forward_impl.2} parent=0 // pred_fallthru
    _
  // Predicated region
  $region18: #{_alignment_forward_impl.2} parent=0 // pred_check
    _
  $region19: #{_alignment_forward_impl.2} parent=0 // pred_check_branch
    %20 = sbr.rel (0) target = $region21
  $region20: #{_alignment_forward_impl.2} parent=0 // pred_region
    _
  $region21: #{_alignment_forward_impl.2} parent=0 // pred_fallthru
    _
  // Predicated region
  $region22: #{_alignment_forward_impl.2} parent=0 // pred_check
    _
  $region23: #{_alignment_forward_impl.2} parent=0 // pred_check_branch
    %22 = sbr.rel (0) target = $region25
  $region24: #{_alignment_forward_impl.2} parent=0 // pred_region
    _
  $region25: #{_alignment_forward_impl.2} parent=0 // pred_fallthru
    _
  %v23 = vld [vmem:[%s0] sm:$0x3]
  %v24 = vld [vmem:[%s2] sm:$0xff]
  %v25 = vld [vmem:[%s2 + $0x8] sm:$0xff]
  %v26 = vld [vmem:[%s2 + $0x10] sm:$0xff]
  %v27 = vld [vmem:[%s2 + $0x18] sm:$0xff]
  %v28 = vld [vmem:[%s2 + $0x20] sm:$0xff]
  %v29 = vld [vmem:[%s2 + $0x28] sm:$0xff]
  %v30 = vld [vmem:[%s2 + $0x30] sm:$0xff]
  %v31 = vld [vmem:[%s2 + $0x38] sm:$0xff]
  %v32 = vld [vmem:[%s2 + $0x40] sm:$0xff]
  %v33 = vld [vmem:[%s2 + $0x48] sm:$0xff]
  %v34 = vld [vmem:[%s2 + $0x50] sm:$0xff]
  %v35 = vld [vmem:[%s2 + $0x58] sm:$0xff]
  %v36 = vld [vmem:[%s2 + $0x60] sm:$0xff]
  %v37 = vld [vmem:[%s2 + $0x68] sm:$0xff]
  %v38 = vld [vmem:[%s2 + $0x70] sm:$0xff]
  %v39 = vld [vmem:[%s2 + $0x78] sm:$0xff]
  %v40 = vld [vmem:[%s3] sm:$0x1]
  %v42 = vperm.slane %v40, 0
  %44 = vmatpush.msra.mxu0 %v39
  %45 = vmatpush.msra.mxu0 %v38
  %46 = vmatpush.msra.mxu0 %v37
  %47 = vmatpush.msra.mxu0 %v36
  %48 = vmatpush.msra.mxu0 %v35
  %49 = vmatpush.msra.mxu0 %v34
  %50 = vmatpush.msra.mxu0 %v33
  %51 = vmatpush.msra.mxu0 %v32
  %52 = vmatpush.msra.mxu0 %v31
  %53 = vmatpush.msra.mxu0 %v30
  %54 = vmatpush.msra.mxu0 %v29
  %55 = vmatpush.msra.mxu0 %v28
  %56 = vmatpush.msra.mxu0 %v27
  %57 = vmatpush.msra.mxu0 %v26
  %58 = vmatpush.msra.mxu0 %v25
  %59 = vmatpush.msra.mxu0 %v24
  %60 = vmatmul.f32.gmra.mxu0 %v23
  %v61 = vpop.f32.mrf.mxu0
  %v62 = vadd.f32 %v42, %v61
  %63 = vdwg.mxu0
  %v64 = vld [vmem:[%s1] sm:$0xff]
  %v65 = vld [vmem:[%s1 + $0x8] sm:$0xff]
  %v66 = vld [vmem:[%s4] sm:$0xff]
  %v67 = vld [vmem:[%s4 + $0x8] sm:$0xff]
  %v68 = vld [vmem:[%s4 + $0x10] sm:$0xff]
  %v69 = vld [vmem:[%s4 + $0x18] sm:$0xff]
  %v70 = vld [vmem:[%s4 + $0x20] sm:$0xff]
  %v71 = vld [vmem:[%s4 + $0x28] sm:$0xff]
  %v72 = vld [vmem:[%s4 + $0x30] sm:$0xff]
  %v73 = vld [vmem:[%s4 + $0x38] sm:$0xff]
  %v74 = vld [vmem:[%s4 + $0x40] sm:$0xff]
  %v75 = vld [vmem:[%s4 + $0x48] sm:$0xff]
  %v76 = vld [vmem:[%s4 + $0x50] sm:$0xff]
  %v77 = vld [vmem:[%s4 + $0x58] sm:$0xff]
  %v78 = vld [vmem:[%s4 + $0x60] sm:$0xff]
  %v79 = vld [vmem:[%s4 + $0x68] sm:$0xff]
  %v80 = vld [vmem:[%s4 + $0x70] sm:$0xff]
  %v81 = vld [vmem:[%s4 + $0x78] sm:$0xff]
  %82 = vmatpush.msra.mxu0 %v81
  %83 = vmatpush.msra.mxu0 %v80
  %84 = vmatpush.msra.mxu0 %v79
  %85 = vmatpush.msra.mxu0 %v78
  %86 = vmatpush.msra.mxu0 %v77
  %87 = vmatpush.msra.mxu0 %v76
  %88 = vmatpush.msra.mxu0 %v75
  %89 = vmatpush.msra.mxu0 %v74
  %90 = vmatpush.msra.mxu0 %v73
  %91 = vmatpush.msra.mxu0 %v72
  %92 = vmatpush.msra.mxu0 %v71
  %93 = vmatpush.msra.mxu0 %v70
  %94 = vmatpush.msra.mxu0 %v69
  %95 = vmatpush.msra.mxu0 %v68
  %96 = vmatpush.msra.mxu0 %v67
  %97 = vmatpush.msra.mxu0 %v66
  %98 = vmatmul.f32.gmra.mxu0 %v64
  %v99 = vpop.f32.mrf.mxu0
  %v100 = vadd.f32 0.0, %v99
  %101 = vmatmul.f32.gmra.mxu0 %v65
  %v102 = vpop.f32.mrf.mxu0
  %v103 = vadd.f32 0.0, %v102
  %104 = vdwg.mxu0
  %v105 = vld [vmem:[%s5] sm:$0x1]
  %v106 = vperm.slane %v62, 0
  %v107 = vadd.f32 %v100, %v106
  %v108 = vtanh.pop %v107
  %v110 = vperm.slane %v105, 0
  %v112 = vmul.f32 %v108, %v110
  %113 = vadd.xlane.f32.xlu0 %v112
  %v114 = vpop.xlane.xlu0 %113
  %v116 = vlaneseq
  %v117 = vand.u32 %v116, 127
  %v118 = vperm.slane %v114, %v117
  %vm120 = vcmask 57344
  %121 = vst.msk [vmem:[%s6] sm:$0x1] %vm120, %v118
  %v122 = vperm.slane %v62, 1
  %v123 = vadd.f32 %v103, %v122
  %v124 = vtanh.pop %v123
  %v125 = vmul.f32 %v124, %v110
  %126 = vadd.xlane.f32.xlu0 %v125
  %v127 = vpop.xlane.xlu0 %126
  %v129 = vperm.slane %v127, %v117
  %131 = vst.msk [vmem:[%s6 + $0x1] sm:$0x1] %vm120, %v129
  // Predicated region
  $region26: #{_alignment_forward_impl.2} parent=0 // pred_check
    _
  $region27: #{_alignment_forward_impl.2} parent=0 // pred_check_branch
    %133 = sbr.rel (0) target = $region29
  $region28: #{_alignment_forward_impl.2} parent=0 // pred_region
    _
  $region29: #{_alignment_forward_impl.2} parent=0 // pred_fallthru
    _
  // Predicated region
  $region30: #{_alignment_forward_impl.2} parent=0 // pred_check
    _
  $region31: #{_alignment_forward_impl.2} parent=0 // pred_check_branch
    %135 = sbr.rel (0) target = $region33
  $region32: #{_alignment_forward_impl.2} parent=0 // pred_region
    _
  $region33: #{_alignment_forward_impl.2} parent=0 // pred_fallthru
    _

// kernel: _alignment_forward_impl.3
$region0: #{_alignment_forward_impl.3}
  #allocation0 [shape = 'u32[]', space=smem, size = 0x4, offset = 0x4, fixed_abs, tag = 'smem constant byte address 0x4 - core index']
  #allocation1 [shape = 'u32[72,128]{1,0:T(1,128)}', space=vmem, size = 0x9000, scoped, tag = 'internal scratch']
  %s0 = inlined_call_operand.vmem [shape: f32[2,8], index: 0, kind: input, shape index: {}]
  %s1 = inlined_call_operand.hbm [shape: f32[2,8], index: 1, kind: output, shape index: {}]
  %s2 = sld [smem:[#allocation0]]
  $region14: #{_alignment_forward_impl.3} parent=0
    _
  %s4 = ssub.s32 1, %s2
  %s5 = scalar_select 0, %s4, %s2
  $region1: #{_alignment_forward_impl.3} parent=0
    #allocation2 [shape = 'u8[1024]{0}', space=vmem, size = 0x400, scoped, tag = 'output window, operand 0, single buffered']
    #allocation3 [shape = 's32[1]{0}', space=sflag, size = 0x4, scoped, tag = 'scoped memory for _alignment_forward_impl.3']
    %6 = vsyncpa [#allocation3], 0
    // Predicated region
    $region2: #{_alignment_forward_impl.3} parent=1 // pred_check
      _
    $region3: #{_alignment_forward_impl.3} parent=1 // pred_check_branch
      %8 = sbr.rel (0) target = $region5
    $region4: #{_alignment_forward_impl.3} parent=1 // pred_region
      _
    $region5: #{_alignment_forward_impl.3} parent=1 // pred_fallthru
      _
    %v9 = vld [vmem:[%s0] sm:$0x3]
    %vm10 = vcmask 58368
    %v11 = vsel %vm10, %v9, -inf
    %12 = vmax.xlane.f32.xlu0 %v11
    %v13 = vpop.xlane.xlu0 %12
    %v14 = vsub.f32 %v9, %v13
    %v15 = vmul.f32 %v14, 1.442695
    %v16 = vpow.pop %v15
    %v17 = vsel %vm10, %v16, 0.0
    %18 = vadd.xlane.f32.xlu0 %v17
    %v19 = vpop.xlane.xlu0 %18
    %v20 = vrcp.pop %v19
    %v21 = vmul.f32 %v19, %v20
    %v22 = vsub.f32 1.0, %v21
    %v23 = vmul.f32 %v20, %v22
    %v24 = vadd.f32 %v20, %v23
    %vm25 = vweird.f32 %v19
    %vm26 = vweird.f32 %v20
    %vm27 = vmor %vm25, %vm26
    %v28 = vsel %vm27, %v20, %v24
    %v29 = vand.u32 2147483647, %v19
    %vm30 = vcmp.eq.f32.partialorder %v29, 8.507059e+37
    %v31 = vand.u32 %v19, 2147483648
    %v32 = vor.u32 1.1754944e-38, %v31
    %v33 = vsel %vm30, %v32, %v28
    %v34 = vmul.f32 1.0, %v33
    %v35 = vmul.f32 %v16, %v34
    %36 = vst.msk [vmem:[#allocation2] sm:$0x3] %vm10, %v35
    // Predicated region
    $region6: #{_alignment_forward_impl.3} parent=1 // pred_check
      _
    $region7: #{_alignment_forward_impl.3} parent=1 // pred_check_branch
      %38 = sbr.rel (0) target = $region9
    $region8: #{_alignment_forward_impl.3} parent=1 // pred_region
      %40 = vsyncadd [#allocation3], 0
      %s42 = sshll.u32 [#allocation2], 4
      %s43 = int_to_ptr.vmem [resolvable:$true] %s42
      %s44 = sshll.u32 %s1, 4
      %s45 = int_to_ptr.hbm [resolvable:$true] %s44
      %47 = dma.vmem_to_hbm [thread:$0]  %s43, 32, %s45, [#allocation3]
    $region9: #{_alignment_forward_impl.3} parent=1 // pred_fallthru
      _
    // Predicated region
    $region10: #{_alignment_forward_impl.3} parent=1 // pred_check
      _
    $region11: #{_alignment_forward_impl.3} parent=1 // pred_check_branch
      %49 = sbr.rel (0) target = $region13
    $region12: #{_alignment_forward_impl.3} parent=1 // pred_region
      %51 = dma.done [#allocation3], 32
    $region13: #{_alignment_forward_impl.3} parent=1 // pred_fallthru
      _
    %52 = vsyncpa [#allocation3], 1

</llo_original>
